<compile_context>
chip_gen: v7x
topology: tpu7x:2x2x1
jax: 0.10.0
libtpu: 0.0.40
codegen_flags: <defaults>
</compile_context>

<pallas_src>
import jax
import jax.numpy as jnp
from jax.experimental import pallas as pl
from jax.experimental.pallas import tpu as pltpu


def _radius2depth_kernel(x_ref, rate_ref, o_ref):
    # x_ref / o_ref: (TB, HW) blocks; rate_ref: (1, HW) resident f32 row.
    x = x_ref[...].astype(jnp.float32)
    rate = rate_ref[...]                       # (1, HW) f32, stride-0 sublane bcast
    o_ref[...] = (x * rate).astype(o_ref.dtype)


def _choose_row_block(rows, cols, itemsize):
    """Largest row block with ~6 MiB tiles (double-buffered in+out ~24 MiB)."""
    target_tile_bytes = 6 * 1024 * 1024
    tb = max(1, target_tile_bytes // (cols * itemsize))
    if tb >= rows:
        return rows                            # full extent: always layout-legal
    # Sublane packing granularity: 8 for 4-byte, 16 for 2-byte, 32 for 1-byte.
    sub = 8 * max(1, 4 // itemsize)
    tb = max(sub, (tb // sub) * sub)
    return min(tb, rows)


def radius2depth(x):
    """x: (N, C, W, W) -> (N, C, W, W), out = x * rate (rate broadcast over N, C)."""
    n, ch, h, w = x.shape
    assert h == w, "Radius2Depth assumes square spatial dims"
    rows = n * ch
    cols = h * w

    # Lane-dense 2-D view of the input (layout plumbing, not compute).
    x2 = x.reshape(rows, cols)

    # Precompute the rate row once in the wrapper (f32, matching the reference).
    f = w / 2.0
    c = (w - 1) / 2.0
    yy, xx = jnp.meshgrid(jnp.arange(w, dtype=jnp.float32),
                          jnp.arange(w, dtype=jnp.float32), indexing="ij")
    rate_row = (f / jnp.sqrt((yy - c) ** 2 + (xx - c) ** 2 + f * f)).reshape(1, cols)

    tb = _choose_row_block(rows, cols, x.dtype.itemsize)
    grid = (pl.cdiv(rows, tb),)

    out2 = pl.pallas_call(
        _radius2depth_kernel,
        out_shape=jax.ShapeDtypeStruct((rows, cols), x.dtype),
        grid_spec=pl.GridSpec(
            grid=grid,
            in_specs=[
                pl.BlockSpec((tb, cols), lambda i: (i, 0)),   # x row block
                pl.BlockSpec((1, cols), lambda i: (0, 0)),    # rate row (resident)
            ],
            out_specs=pl.BlockSpec((tb, cols), lambda i: (i, 0)),
        ),
        compiler_params=pltpu.CompilerParams(
            dimension_semantics=("parallel",),
            vmem_limit_bytes=48 * 1024 * 1024,
        ),
    )(x2, rate_row)

    return out2.reshape(n, ch, h, w)


def radius2depth_ref(x):
    """Pure-JAX reference mirroring the PyTorch module."""
    n, ch, h, w = x.shape
    f = w / 2.0
    c = (w - 1) / 2.0
    yy, xx = jnp.meshgrid(jnp.arange(w, dtype=jnp.float32),
                          jnp.arange(w, dtype=jnp.float32), indexing="ij")
    yy = yy - c
    xx = xx - c
    rate = f / jnp.sqrt(yy ** 2 + xx ** 2 + f ** 2)
    return (x.astype(jnp.float32) * rate[None, None, :, :]).astype(x.dtype)


if __name__ == "__main__":
    key = jax.random.PRNGKey(0)
    N, C, W = 2, 4, 16
    x = jax.random.normal(key, (N, C, W, W), dtype=jnp.float32)

    out = radius2depth(x)
    out = jax.block_until_ready(out)

    ref = radius2depth_ref(x)
    assert out.shape == ref.shape and out.dtype == ref.dtype
    assert jnp.allclose(out, ref, atol=1e-5, rtol=1e-5), "mismatch vs reference"

    print("KERNEL_OK")
</pallas_src>

<mosaic_0001>
module attributes {stable_mosaic.version = 11 : i64} {
  func.func @_radius2depth_kernel(%arg0: i32, %arg1: memref<8x256xf32, #tpu.memory_space<vmem>>, %arg2: memref<1x256xf32, #tpu.memory_space<vmem>>, %arg3: memref<8x256xf32, #tpu.memory_space<vmem>>) attributes {dimension_semantics = [#tpu.dimension_semantics<parallel>], iteration_bounds = array<i64: 1>, scalar_prefetch = 0 : i64, scratch_operands = 0 : i64, tpu.core_type = #tpu.core_type<tc>, window_params = [{transform_indices = @transform_0, window_bounds = array<i64: 8, 256>}, {pipeline_mode = #tpu.pipeline_mode<synchronous>, transform_indices = @transform_1, window_bounds = array<i64: 1, 256>}, {transform_indices = @transform_2, window_bounds = array<i64: 8, 256>}]} {
    %c0 = arith.constant 0 : index
    %c0_0 = arith.constant 0 : index
    %0 = vector.load %arg1[%c0, %c0_0] : memref<8x256xf32, #tpu.memory_space<vmem>>, vector<8x256xf32>
    %c0_1 = arith.constant 0 : index
    %c0_2 = arith.constant 0 : index
    %1 = vector.load %arg2[%c0_1, %c0_2] : memref<1x256xf32, #tpu.memory_space<vmem>>, vector<1x256xf32>
    %2 = vector.broadcast %1 : vector<1x256xf32> to vector<8x256xf32>
    %3 = arith.mulf %0, %2 : vector<8x256xf32>
    %c0_3 = arith.constant 0 : index
    %c0_4 = arith.constant 0 : index
    %4 = vector.load %arg3[%c0_3, %c0_4] : memref<8x256xf32, #tpu.memory_space<vmem>>, vector<8x256xf32>
    tpu.vector_store %arg3[%c0_3, %c0_4], %3 {strides = array<i32>} : memref<8x256xf32, #tpu.memory_space<vmem>>, vector<8x256xf32>,
    return
  }
  func.func @transform_0(%arg0: i32) -> (i32, i32) {
    %c0_i32 = arith.constant 0 : i32
    %c0_i32_0 = arith.constant 0 : i32
    return %arg0, %c0_i32 : i32, i32
  }
  func.func @transform_1(%arg0: i32) -> (i32, i32) {
    %c0_i32 = arith.constant 0 : i32
    %c0_i32_0 = arith.constant 0 : i32
    %c0_i32_1 = arith.constant 0 : i32
    return %c0_i32, %c0_i32_0 : i32, i32
  }
  func.func @transform_2(%arg0: i32) -> (i32, i32) {
    %c0_i32 = arith.constant 0 : i32
    %c0_i32_0 = arith.constant 0 : i32
    return %arg0, %c0_i32 : i32, i32
  }
}

</mosaic_0001>

<llo_original>
// kernel: tpu_custom_call.1
$region0: #{tpu_custom_call.1}
  #allocation0 [shape = 'u32[]', space=smem, size = 0x4, offset = 0x4, fixed_abs, tag = 'smem constant byte address 0x4 - core index']
  #allocation1 [shape = 'u32[144,128]{1,0:T(1,128)}', space=vmem, size = 0x12000, scoped, tag = 'internal scratch']
  %s0 = inlined_call_operand.hbm [shape: f32[8,256], index: 0, kind: input, shape index: {}]
  %s1 = inlined_call_operand.vmem [shape: f32[1,256], index: 1, kind: input, shape index: {}]
  %s2 = inlined_call_operand.hbm [shape: f32[8,256], index: 2, kind: output, shape index: {}]
  %s3 = sld [smem:[#allocation0]]
  $region22: #{tpu_custom_call.1} parent=0
    _
  %s5 = ssub.s32 1, %s3
  %s6 = scalar_select 0, %s5, %s3
  $region1: #{tpu_custom_call.1} parent=0
    #allocation2 [shape = 'u8[8192]{0}', space=vmem, size = 0x2000, scoped, tag = 'input window, operand 0, single buffered']
    #allocation3 [shape = 's32[1]{0}', space=sflag, size = 0x4, scoped, tag = 'scoped memory for tpu_custom_call.1']
    #allocation4 [shape = 's32[1]{0}', space=sflag, size = 0x4, scoped, tag = 'scoped memory for tpu_custom_call.1']
    #allocation5 [shape = 'u8[8192]{0}', space=vmem, size = 0x2000, scoped, tag = 'output window, operand 0, single buffered']
    %7 = vsyncpa [#allocation3], 0
    %8 = vsyncpa [#allocation4], 0
    // Predicated region
    $region2: #{tpu_custom_call.1} parent=1 // pred_check
      _
    $region3: #{tpu_custom_call.1} parent=1 // pred_check_branch
      %10 = sbr.rel (0) target = $region5
    $region4: #{tpu_custom_call.1} parent=1 // pred_region
      %s12 = ssub.s32 256, 256
      %13 = vsyncadd [#allocation3], %s12
      %s15 = sshll.u32 [#allocation2], 4
      %s16 = int_to_ptr.vmem [resolvable:$true] %s15
      %18 = dma.hbm_to_vmem [thread:$0]  %s0, 256, %s16, [#allocation3]
    $region5: #{tpu_custom_call.1} parent=1 // pred_fallthru
      _
    // Predicated region
    $region6: #{tpu_custom_call.1} parent=1 // pred_check
      _
    $region7: #{tpu_custom_call.1} parent=1 // pred_check_branch
      %20 = sbr.rel (0) target = $region9
    $region8: #{tpu_custom_call.1} parent=1 // pred_region
      _
    $region9: #{tpu_custom_call.1} parent=1 // pred_fallthru
      _
    // Predicated region
    $region10: #{tpu_custom_call.1} parent=1 // pred_check
      _
    $region11: #{tpu_custom_call.1} parent=1 // pred_check_branch
      %22 = sbr.rel (0) target = $region13
    $region12: #{tpu_custom_call.1} parent=1 // pred_region
      %23 = dma.done [#allocation3], 256
    $region13: #{tpu_custom_call.1} parent=1 // pred_fallthru
      _
    %v24 = vld [vmem:[#allocation2] sm:$0xff]
    %v25 = vld [vmem:[#allocation2 + $0x8] sm:$0xff]
    %v26 = vld [vmem:[%s1] sm:$0x3]
    %v28 = vlaneseq
    %v29 = vshrl.u32 %v28, 7
    %v30 = vsub.s32 0, %v29
    %v31 = vrot.slane %v26, %v30
    %v32 = vlaneseq
    %v33 = vshrl.u32 %v32, 7
    %v34 = vsub.s32 1, %v33
    %v35 = vrot.slane %v26, %v34
    %v38 = vmul.f32 %v24, %v31
    %v39 = vmul.f32 %v25, %v35
    %40 = vst [vmem:[#allocation5] sm:$0xff] %v38
    %41 = vst [vmem:[#allocation5 + $0x8] sm:$0xff] %v39
    // Predicated region
    $region14: #{tpu_custom_call.1} parent=1 // pred_check
      _
    $region15: #{tpu_custom_call.1} parent=1 // pred_check_branch
      %43 = sbr.rel (0) target = $region17
    $region16: #{tpu_custom_call.1} parent=1 // pred_region
      %s45 = ssub.s32 256, 256
      %46 = vsyncadd [#allocation4], %s45
      %s48 = sshll.u32 [#allocation5], 4
      %s49 = int_to_ptr.vmem [resolvable:$true] %s48
      %51 = dma.vmem_to_hbm [thread:$0]  %s49, 256, %s2, [#allocation4]
    $region17: #{tpu_custom_call.1} parent=1 // pred_fallthru
      _
    // Predicated region
    $region18: #{tpu_custom_call.1} parent=1 // pred_check
      _
    $region19: #{tpu_custom_call.1} parent=1 // pred_check_branch
      %53 = sbr.rel (0) target = $region21
    $region20: #{tpu_custom_call.1} parent=1 // pred_region
      %54 = dma.done [#allocation4], 256
    $region21: #{tpu_custom_call.1} parent=1 // pred_fallthru
      _
    %55 = vsyncpa [#allocation3], 1
    %56 = vsyncpa [#allocation4], 1

</llo_original>
